<compile_context>
chip_gen: v7x
topology: tpu7x:2x2x1
jax: 0.10.0
libtpu: 0.0.40
codegen_flags: <defaults>
</compile_context>

<pallas_src>
import functools

import jax
import jax.numpy as jnp
from jax.experimental import pallas as pl
from jax.experimental.pallas import tpu as pltpu


def _cdiv(a, b):
    return -(-a // b)


def _round_up(x, m):
    return ((x + m - 1) // m) * m


def _sublane_for_dtype(dtype):
    """Sublane multiple for the second-to-last tile dim: 8/f32, 16/bf16, 32/i8."""
    bits = jnp.dtype(dtype).itemsize * 8
    return max(8, 256 // bits)


def fuse_view_block_params(w_priv, b_priv, w_comm, b_comm):
    """One-time parameter prep (call at init, NOT per forward step).

    w_* : [D_in, D_out] (pre-transposed vs. nn.Linear's [D_out, D_in])
    b_* : [1, D_out]
    Returns (w_fused [D_in, 2*D_out], b_fused [1, 2*D_out]); private half first.
    """
    w_fused = jnp.concatenate([w_priv, w_comm], axis=1)
    b_fused = jnp.concatenate([b_priv, b_comm], axis=1)
    return w_fused, b_fused


def _view_block_kernel(x_ref, w_ref, b_ref, priv_ref, comm_ref):
    """One fused projection for a [TM, D_in] batch tile.

    x_ref    : [TM, D_in]       activation tile (streamed per grid step)
    w_ref    : [D_in, 2*D_out]  fused [W_priv | W_comm] weights (VMEM-resident)
    b_ref    : [1, 2*D_out]     fused biases (VMEM-resident)
    priv_ref : [TM, D_out]      relu(x @ W_priv + b_priv)
    comm_ref : [TM, D_out]      relu(x @ W_comm + b_comm)
    """
    d_out = priv_ref.shape[-1]
    acc = jnp.dot(x_ref[...], w_ref[...], preferred_element_type=jnp.float32)
    # Single VPU epilogue pass: bias add + ReLU on the f32 accumulator.
    act = jnp.maximum(acc + b_ref[...].astype(jnp.float32), 0.0)
    priv_ref[...] = act[:, :d_out].astype(priv_ref.dtype)
    comm_ref[...] = act[:, d_out:].astype(comm_ref.dtype)


@functools.partial(jax.jit, static_argnames=("block_m", "min_batch_tiles"))
def view_block_forward(x_view, w_fused, b_fused, *, block_m=512,
                       min_batch_tiles=2):
    """Forward pass of ViewBlock.

    x_view  : [B, D_in]
    w_fused : [D_in, 2*D_out]   from fuse_view_block_params (private half first)
    b_fused : [1, 2*D_out]

    Returns (x_private, x_comm_feature), each [B, D_out].
    """
    B, D_in = x_view.shape
    n_fused = w_fused.shape[1]
    d_out = n_fused // 2

    # --- batch tiling: even split, minimal padding, >=2 tiles when possible ---
    sub = _sublane_for_dtype(x_view.dtype)
    ntiles = _cdiv(B, block_m)
    if B >= min_batch_tiles * sub:
        ntiles = max(ntiles, min_batch_tiles)   # keep both v7x TCs busy
    tm = _round_up(_cdiv(B, ntiles), sub)
    if tm >= B:
        tm = B                                  # whole-batch block (full-dim exception)
    grid = (_cdiv(B, tm),)                      # partial last tile handled by Pallas

    # --- explicit VMEM budget (fits v7x's 64 MiB / TC; lifts v5e's 16 MiB default) ---
    x_item = jnp.dtype(x_view.dtype).itemsize
    w_item = jnp.dtype(w_fused.dtype).itemsize
    vmem_needed = (
        2 * tm * D_in * x_item          # double-buffered activation tile
        + 2 * D_in * n_fused * w_item   # resident fused weight (x2 safety)
        + 2 * n_fused * w_item          # resident fused bias
        + 2 * 2 * tm * d_out * x_item   # two double-buffered output tiles
    )
    vmem_limit = int(min(64 * 1024 * 1024,
                         max(16 * 1024 * 1024, 2 * vmem_needed)))

    out_shape = (jax.ShapeDtypeStruct((B, d_out), x_view.dtype),
                 jax.ShapeDtypeStruct((B, d_out), x_view.dtype))

    x_private, x_comm_feature = pl.pallas_call(
        _view_block_kernel,
        out_shape=out_shape,
        grid=grid,
        in_specs=[
            # activation tile: streams over the batch grid axis
            pl.BlockSpec((tm, D_in), lambda i: (i, 0)),
            # fused weight & bias: same block every step -> VMEM resident
            pl.BlockSpec((D_in, n_fused), lambda i: (0, 0)),
            pl.BlockSpec((1, n_fused), lambda i: (0, 0)),
        ],
        out_specs=[
            pl.BlockSpec((tm, d_out), lambda i: (i, 0)),
            pl.BlockSpec((tm, d_out), lambda i: (i, 0)),
        ],
        compiler_params=pltpu.CompilerParams(
            dimension_semantics=("parallel",),   # shards batch tiles across TCs on v7x
            vmem_limit_bytes=vmem_limit,
        ),
    )(x_view, w_fused, b_fused)

    return x_private, x_comm_feature


def init_view_block_params(key, input_feature_dim, comm_feature_dim,
                           dtype=jnp.float32):
    """Deterministic synthetic parameters matching nn.Linear init ranges,
    stored pre-transposed as [D_in, D_out]."""
    k1, k2, k3, k4 = jax.random.split(key, 4)
    bound = 1.0 / jnp.sqrt(jnp.float32(input_feature_dim))
    w_comm = jax.random.uniform(k1, (input_feature_dim, comm_feature_dim),
                                dtype, -bound, bound)
    b_comm = jax.random.uniform(k2, (1, comm_feature_dim), dtype, -bound, bound)
    w_priv = jax.random.uniform(k3, (input_feature_dim, comm_feature_dim),
                                dtype, -bound, bound)
    b_priv = jax.random.uniform(k4, (1, comm_feature_dim), dtype, -bound, bound)
    return w_priv, b_priv, w_comm, b_comm


if __name__ == "__main__":
    key = jax.random.PRNGKey(0)
    k_x, k_p = jax.random.split(key)

    v_num = 3                 # unused in forward (matches the PyTorch module)
    batch = 8
    input_feature_dim = 32
    comm_feature_dim = 32

    x_view = jax.random.normal(k_x, (batch, input_feature_dim), jnp.float32)
    w_priv, b_priv, w_comm, b_comm = init_view_block_params(
        k_p, input_feature_dim, comm_feature_dim)

    # One-time parameter fusion -- hoisted out of the per-call forward.
    w_fused, b_fused = fuse_view_block_params(w_priv, b_priv, w_comm, b_comm)
    w_fused, b_fused = jax.block_until_ready((w_fused, b_fused))

    x_private, x_comm_feature = view_block_forward(x_view, w_fused, b_fused)
    jax.block_until_ready((x_private, x_comm_feature))

    # reference check in plain JAX
    ref_priv = jnp.maximum(x_view @ w_priv + b_priv, 0.0)
    ref_comm = jnp.maximum(x_view @ w_comm + b_comm, 0.0)
    assert x_private.shape == (batch, comm_feature_dim)
    assert x_comm_feature.shape == (batch, comm_feature_dim)
    assert jnp.allclose(x_private, ref_priv, atol=1e-5, rtol=1e-5)
    assert jnp.allclose(x_comm_feature, ref_comm, atol=1e-5, rtol=1e-5)

    # Non-tile-multiple batch: exercises the partial last tile (no wrapper-side
    # padding of x) and a >=2-step "parallel" grid (both TensorCores on v7x).
    x_big = jax.random.normal(k_x, (300, input_feature_dim), jnp.float32)
    p_big, c_big = view_block_forward(x_big, w_fused, b_fused)
    jax.block_until_ready((p_big, c_big))
    assert jnp.allclose(p_big, jnp.maximum(x_big @ w_priv + b_priv, 0.0),
                        atol=1e-5, rtol=1e-5)
    assert jnp.allclose(c_big, jnp.maximum(x_big @ w_comm + b_comm, 0.0),
                        atol=1e-5, rtol=1e-5)

    # bf16 path: halves HBM read/write bytes; dtype-aware (16-row) sublane tiling.
    xb = jax.random.normal(k_x, (32, input_feature_dim), jnp.bfloat16)
    wb = w_fused.astype(jnp.bfloat16)
    bb = b_fused.astype(jnp.bfloat16)
    p_bf, c_bf = view_block_forward(xb, wb, bb)
    jax.block_until_ready((p_bf, c_bf))
    xf = xb.astype(jnp.float32)
    ref_pb = jnp.maximum(
        xf @ wb[:, :comm_feature_dim].astype(jnp.float32)
        + bb[:, :comm_feature_dim].astype(jnp.float32), 0.0)
    ref_cb = jnp.maximum(
        xf @ wb[:, comm_feature_dim:].astype(jnp.float32)
        + bb[:, comm_feature_dim:].astype(jnp.float32), 0.0)
    assert p_bf.shape == (32, comm_feature_dim)
    assert c_bf.shape == (32, comm_feature_dim)
    assert jnp.allclose(p_bf.astype(jnp.float32), ref_pb, atol=1e-1, rtol=1e-1)
    assert jnp.allclose(c_bf.astype(jnp.float32), ref_cb, atol=1e-1, rtol=1e-1)

    print("KERNEL_OK")
</pallas_src>

<mosaic_0001>
module attributes {stable_mosaic.version = 11 : i64} {
  func.func @_view_block_kernel(%arg0: i32, %arg1: memref<8x32xf32, #tpu.memory_space<vmem>>, %arg2: memref<32x64xf32, #tpu.memory_space<vmem>>, %arg3: memref<1x64xf32, #tpu.memory_space<vmem>>, %arg4: memref<8x32xf32, #tpu.memory_space<vmem>>, %arg5: memref<8x32xf32, #tpu.memory_space<vmem>>) attributes {dimension_semantics = [#tpu.dimension_semantics<parallel>], iteration_bounds = array<i64: 1>, scalar_prefetch = 0 : i64, scratch_operands = 0 : i64, tpu.core_type = #tpu.core_type<tc>, window_params = [{transform_indices = @transform_0, window_bounds = array<i64: 8, 32>}, {pipeline_mode = #tpu.pipeline_mode<synchronous>, transform_indices = @transform_1, window_bounds = array<i64: 32, 64>}, {pipeline_mode = #tpu.pipeline_mode<synchronous>, transform_indices = @transform_2, window_bounds = array<i64: 1, 64>}, {transform_indices = @transform_3, window_bounds = array<i64: 8, 32>}, {transform_indices = @transform_4, window_bounds = array<i64: 8, 32>}]} {
    %c0 = arith.constant 0 : index
    %c0_0 = arith.constant 0 : index
    %0 = vector.load %arg1[%c0, %c0_0] : memref<8x32xf32, #tpu.memory_space<vmem>>, vector<8x32xf32>
    %c0_1 = arith.constant 0 : index
    %c0_2 = arith.constant 0 : index
    %1 = vector.load %arg2[%c0_1, %c0_2] : memref<32x64xf32, #tpu.memory_space<vmem>>, vector<32x64xf32>
    %cst = arith.constant dense<0.000000e+00> : vector<8x64xf32>
    %2 = tpu.matmul %0, %1, %cst {dimension_numbers = #tpu.dot_dimension_numbers<[1], [0], [0], [1], [0, 0, 1, 1], [], []>} : vector<8x32xf32>, vector<32x64xf32>, vector<8x64xf32> -> vector<8x64xf32>
    %c0_3 = arith.constant 0 : index
    %c0_4 = arith.constant 0 : index
    %3 = vector.load %arg3[%c0_3, %c0_4] : memref<1x64xf32, #tpu.memory_space<vmem>>, vector<1x64xf32>
    %4 = vector.broadcast %3 : vector<1x64xf32> to vector<8x64xf32>
    %5 = arith.addf %2, %4 : vector<8x64xf32>
    %cst_5 = arith.constant 0.000000e+00 : f32
    %6 = vector.broadcast %cst_5 : f32 to vector<8x64xf32>
    %7 = arith.maximumf %5, %6 : vector<8x64xf32>
    %8 = vector.extract_strided_slice %7 {offsets = [0, 0], sizes = [8, 32], strides = [1, 1]} : vector<8x64xf32> to vector<8x32xf32>
    %c0_6 = arith.constant 0 : index
    %c0_7 = arith.constant 0 : index
    %9 = vector.load %arg4[%c0_6, %c0_7] : memref<8x32xf32, #tpu.memory_space<vmem>>, vector<8x32xf32>
    tpu.vector_store %arg4[%c0_6, %c0_7], %8 {strides = array<i32>} : memref<8x32xf32, #tpu.memory_space<vmem>>, vector<8x32xf32>,
    %10 = vector.extract_strided_slice %7 {offsets = [0, 32], sizes = [8, 32], strides = [1, 1]} : vector<8x64xf32> to vector<8x32xf32>
    %c0_8 = arith.constant 0 : index
    %c0_9 = arith.constant 0 : index
    %11 = vector.load %arg5[%c0_8, %c0_9] : memref<8x32xf32, #tpu.memory_space<vmem>>, vector<8x32xf32>
    tpu.vector_store %arg5[%c0_8, %c0_9], %10 {strides = array<i32>} : memref<8x32xf32, #tpu.memory_space<vmem>>, vector<8x32xf32>,
    return
  }
  func.func @transform_0(%arg0: i32) -> (i32, i32) {
    %c0_i32 = arith.constant 0 : i32
    %c0_i32_0 = arith.constant 0 : i32
    return %arg0, %c0_i32 : i32, i32
  }
  func.func @transform_1(%arg0: i32) -> (i32, i32) {
    %c0_i32 = arith.constant 0 : i32
    %c0_i32_0 = arith.constant 0 : i32
    %c0_i32_1 = arith.constant 0 : i32
    return %c0_i32, %c0_i32_0 : i32, i32
  }
  func.func @transform_2(%arg0: i32) -> (i32, i32) {
    %c0_i32 = arith.constant 0 : i32
    %c0_i32_0 = arith.constant 0 : i32
    %c0_i32_1 = arith.constant 0 : i32
    return %c0_i32, %c0_i32_0 : i32, i32
  }
  func.func @transform_3(%arg0: i32) -> (i32, i32) {
    %c0_i32 = arith.constant 0 : i32
    %c0_i32_0 = arith.constant 0 : i32
    return %arg0, %c0_i32 : i32, i32
  }
  func.func @transform_4(%arg0: i32) -> (i32, i32) {
    %c0_i32 = arith.constant 0 : i32
    %c0_i32_0 = arith.constant 0 : i32
    return %arg0, %c0_i32 : i32, i32
  }
}

</mosaic_0001>

<llo_original>
// kernel: view_block_forward.1
$region0: #{view_block_forward.1}
  #allocation0 [shape = 'u32[]', space=smem, size = 0x4, offset = 0x4, fixed_abs, tag = 'smem constant byte address 0x4 - core index']
  #allocation1 [shape = 'u32[144,128]{1,0:T(1,128)}', space=vmem, size = 0x12000, scoped, tag = 'internal scratch']
  %s0 = inlined_call_operand.hbm [shape: f32[8,32], index: 0, kind: input, shape index: {}]
  %s1 = inlined_call_operand.hbm [shape: f32[32,64], index: 1, kind: input, shape index: {}]
  %s2 = inlined_call_operand.vmem [shape: f32[1,64], index: 2, kind: input, shape index: {}]
  %s3 = inlined_call_operand.hbm [shape: f32[8,32], index: 3, kind: output, shape index: {0}]
  %s4 = inlined_call_operand.hbm [shape: f32[8,32], index: 4, kind: output, shape index: {1}]
  %5 = xla_tuple %s3, %s4
  %s6 = sld [smem:[#allocation0]]
  $region38: #{view_block_forward.1} parent=0
    _
  %s8 = ssub.s32 1, %s6
  %s9 = scalar_select 0, %s8, %s6
  $region1: #{view_block_forward.1} parent=0
    #allocation2 [shape = 'u8[4096]{0}', space=vmem, size = 0x1000, scoped, tag = 'input window, operand 0, single buffered']
    #allocation3 [shape = 's32[1]{0}', space=sflag, size = 0x4, scoped, tag = 'scoped memory for view_block_forward.1']
    #allocation4 [shape = 's32[1]{0}', space=sflag, size = 0x4, scoped, tag = 'scoped memory for view_block_forward.1']
    #allocation5 [shape = 'u8[16384]{0}', space=vmem, size = 0x4000, scoped, tag = 'input window, operand 1, single buffered']
    #allocation6 [shape = 's32[1]{0}', space=sflag, size = 0x4, scoped, tag = 'scoped memory for view_block_forward.1']
    #allocation7 [shape = 'u8[4096]{0}', space=vmem, size = 0x1000, scoped, tag = 'output window, operand 0, single buffered']
    #allocation8 [shape = 'u8[4096]{0}', space=vmem, size = 0x1000, scoped, tag = 'output window, operand 1, single buffered']
    #allocation9 [shape = 's32[1]{0}', space=sflag, size = 0x4, scoped, tag = 'scoped memory for view_block_forward.1']
    %10 = vsyncpa [#allocation3], 0
    %11 = vsyncpa [#allocation6], 0
    %12 = vsyncpa [#allocation4], 0
    %13 = vsyncpa [#allocation9], 0
    // Predicated region
    $region2: #{view_block_forward.1} parent=1 // pred_check
      _
    $region3: #{view_block_forward.1} parent=1 // pred_check_branch
      %15 = sbr.rel (0) target = $region5
    $region4: #{view_block_forward.1} parent=1 // pred_region
      %s17 = ssub.s32 128, 128
      %18 = vsyncadd [#allocation3], %s17
      %s20 = sshll.u32 [#allocation2], 4
      %s21 = int_to_ptr.vmem [resolvable:$true] %s20
      %23 = dma.hbm_to_vmem [thread:$0]  %s0, 128, %s21, [#allocation3]
    $region5: #{view_block_forward.1} parent=1 // pred_fallthru
      _
    // Predicated region
    $region6: #{view_block_forward.1} parent=1 // pred_check
      _
    $region7: #{view_block_forward.1} parent=1 // pred_check_branch
      %25 = sbr.rel (0) target = $region9
    $region8: #{view_block_forward.1} parent=1 // pred_region
      %s27 = ssub.s32 512, 512
      %28 = vsyncadd [#allocation6], %s27
      %s29 = sshll.u32 [#allocation5], 4
      %s30 = int_to_ptr.vmem [resolvable:$true] %s29
      %35 = dma.hbm_to_vmem [thread:$0]  %s1, 512, %s30, [#allocation6], 128, 128, 8
    $region9: #{view_block_forward.1} parent=1 // pred_fallthru
      _
    // Predicated region
    $region10: #{view_block_forward.1} parent=1 // pred_check
      _
    $region11: #{view_block_forward.1} parent=1 // pred_check_branch
      %37 = sbr.rel (0) target = $region13
    $region12: #{view_block_forward.1} parent=1 // pred_region
      _
    $region13: #{view_block_forward.1} parent=1 // pred_fallthru
      _
    // Predicated region
    $region14: #{view_block_forward.1} parent=1 // pred_check
      _
    $region15: #{view_block_forward.1} parent=1 // pred_check_branch
      %39 = sbr.rel (0) target = $region17
    $region16: #{view_block_forward.1} parent=1 // pred_region
      %40 = dma.done [#allocation3], 128
    $region17: #{view_block_forward.1} parent=1 // pred_fallthru
      _
    // Predicated region
    $region18: #{view_block_forward.1} parent=1 // pred_check
      _
    $region19: #{view_block_forward.1} parent=1 // pred_check_branch
      %42 = sbr.rel (0) target = $region21
    $region20: #{view_block_forward.1} parent=1 // pred_region
      %43 = dma.done [#allocation6], 512
    $region21: #{view_block_forward.1} parent=1 // pred_fallthru
      _
    %v44 = vld [vmem:[#allocation2] sm:$0xff]
    %v45 = vld [vmem:[#allocation5] sm:$0xff]
    %v46 = vld [vmem:[#allocation5 + $0x8] sm:$0xff]
    %v47 = vld [vmem:[#allocation5 + $0x10] sm:$0xff]
    %v48 = vld [vmem:[#allocation5 + $0x18] sm:$0xff]
    %v49 = vld [vmem:[%s2] sm:$0x1]
    %v51 = vlaneseq
    %v52 = vshrl.u32 %v51, 7
    %v53 = vsub.s32 0, %v52
    %v54 = vrot.slane %v49, %v53
    %vm56 = vcmask 261120
    %v58 = vsel %vm56, %v44, 0
    %60 = vmatprep.subr.mxu0 0.0
    %61 = vmatpush1.msra.mxu0 %v45
    %62 = vmatprep.subr.mxu0 0.0
    %63 = vmatpush1.msra.mxu0 %v46
    %64 = vmatprep.subr.mxu0 0.0
    %65 = vmatpush1.msra.mxu0 %v47
    %66 = vmatprep.subr.mxu0 0.0
    %67 = vmatpush1.msra.mxu0 %v48
    %68 = vmatprep.subr.mxu0 0.0
    %69 = vmatpush1.msra.mxu0 0.0
    %70 = vmatprep.subr.mxu0 0.0
    %71 = vmatpush1.msra.mxu0 0.0
    %72 = vmatprep.subr.mxu0 0.0
    %73 = vmatpush1.msra.mxu0 0.0
    %74 = vmatprep.subr.mxu0 0.0
    %75 = vmatpush1.msra.mxu0 0.0
    %76 = vmatprep.subr.mxu0 0.0
    %77 = vmatpush1.msra.mxu0 0.0
    %78 = vmatprep.subr.mxu0 0.0
    %79 = vmatpush1.msra.mxu0 0.0
    %80 = vmatprep.subr.mxu0 0.0
    %81 = vmatpush1.msra.mxu0 0.0
    %82 = vmatprep.subr.mxu0 0.0
    %83 = vmatpush1.msra.mxu0 0.0
    %84 = vmatprep.subr.mxu0 0.0
    %85 = vmatpush1.msra.mxu0 0.0
    %86 = vmatprep.subr.mxu0 0.0
    %87 = vmatpush1.msra.mxu0 0.0
    %88 = vmatprep.subr.mxu0 0.0
    %89 = vmatpush1.msra.mxu0 0.0
    %90 = vmatprep.subr.mxu0 0.0
    %91 = vmatpush1.msra.mxu0 0.0
    %92 = vmatprep.subr.mxu0 0.0
    %93 = vmatpush1.msra.mxu0 0.0
    %94 = vmatprep.subr.mxu0 0.0
    %95 = vmatpush1.msra.mxu0 0.0
    %96 = vmatprep.subr.mxu0 0.0
    %97 = vmatpush1.msra.mxu0 0.0
    %98 = vmatprep.subr.mxu0 0.0
    %99 = vmatpush1.msra.mxu0 0.0
    %100 = vmatprep.subr.mxu0 0.0
    %101 = vmatpush1.msra.mxu0 0.0
    %102 = vmatprep.subr.mxu0 0.0
    %103 = vmatpush1.msra.mxu0 0.0
    %104 = vmatprep.subr.mxu0 0.0
    %105 = vmatpush1.msra.mxu0 0.0
    %106 = vmatprep.subr.mxu0 0.0
    %107 = vmatpush1.msra.mxu0 0.0
    %108 = vmatprep.subr.mxu0 0.0
    %109 = vmatpush1.msra.mxu0 0.0
    %110 = vmatprep.subr.mxu0 0.0
    %111 = vmatpush1.msra.mxu0 0.0
    %112 = vmatprep.subr.mxu0 0.0
    %113 = vmatpush1.msra.mxu0 0.0
    %114 = vmatprep.subr.mxu0 0.0
    %115 = vmatpush1.msra.mxu0 0.0
    %116 = vmatprep.subr.mxu0 0.0
    %117 = vmatpush1.msra.mxu0 0.0
    %118 = vmatprep.subr.mxu0 0.0
    %119 = vmatpush1.msra.mxu0 0.0
    %120 = vmatprep.subr.mxu0 0.0
    %121 = vmatpush1.msra.mxu0 0.0
    %122 = vmatprep.subr.mxu0 0.0
    %123 = vmatpush1.msra.mxu0 0.0
    %124 = vmatprep.mubr.f32.mxu0 0.0
    %125 = vmatmul.mubr.f32.gmra.mrb[0].mxu0 %v58
    %v126 = vpop.f32.mrb[0].mxu0
    %v127 = vadd.f32 %v54, %v126
    %v128 = vpop.f32.mrb[0].mxu0
    %129 = vdwg.mxu0
    %v130 = vmax.f32 %v127, 0.0
    %131 = vst.msk [vmem:[#allocation7] sm:$0xff] %vm56, %v130
    %133 = vrot.lane.b32.xlu0 %v130, 96
    %v134 = vpop.permute.xlu0 %133
    %136 = vst.msk [vmem:[#allocation8] sm:$0xff] %vm56, %v134
    // Predicated region
    $region22: #{view_block_forward.1} parent=1 // pred_check
      _
    $region23: #{view_block_forward.1} parent=1 // pred_check_branch
      %138 = sbr.rel (0) target = $region25
    $region24: #{view_block_forward.1} parent=1 // pred_region
      %s140 = ssub.s32 128, 128
      %141 = vsyncadd [#allocation4], %s140
      %s143 = sshll.u32 [#allocation7], 4
      %s144 = int_to_ptr.vmem [resolvable:$true] %s143
      %146 = dma.vmem_to_hbm [thread:$0]  %s144, 128, %s3, [#allocation4]
    $region25: #{view_block_forward.1} parent=1 // pred_fallthru
      _
    // Predicated region
    $region26: #{view_block_forward.1} parent=1 // pred_check
      _
    $region27: #{view_block_forward.1} parent=1 // pred_check_branch
      %148 = sbr.rel (0) target = $region29
    $region28: #{view_block_forward.1} parent=1 // pred_region
      %s150 = ssub.s32 128, 128
      %151 = vsyncadd [#allocation9], %s150
      %s153 = sshll.u32 [#allocation8], 4
      %s154 = int_to_ptr.vmem [resolvable:$true] %s153
      %156 = dma.vmem_to_hbm [thread:$0]  %s154, 128, %s4, [#allocation9]
    $region29: #{view_block_forward.1} parent=1 // pred_fallthru
      _
    // Predicated region
    $region30: #{view_block_forward.1} parent=1 // pred_check
      _
    $region31: #{view_block_forward.1} parent=1 // pred_check_branch
      %158 = sbr.rel (0) target = $region33
    $region32: #{view_block_forward.1} parent=1 // pred_region
      %159 = dma.done [#allocation4], 128
    $region33: #{view_block_forward.1} parent=1 // pred_fallthru
      _
    // Predicated region
    $region34: #{view_block_forward.1} parent=1 // pred_check
      _
    $region35: #{view_block_forward.1} parent=1 // pred_check_branch
      %161 = sbr.rel (0) target = $region37
    $region36: #{view_block_forward.1} parent=1 // pred_region
      %162 = dma.done [#allocation9], 128
    $region37: #{view_block_forward.1} parent=1 // pred_fallthru
      _
    %163 = vsyncpa [#allocation3], 1
    %164 = vsyncpa [#allocation6], 1
    %165 = vsyncpa [#allocation4], 1
    %166 = vsyncpa [#allocation9], 1

</llo_original>
